<compile_context>
chip_gen: v7x
topology: tpu7x:2x2x1
jax: 0.10.0
libtpu: 0.0.40
codegen_flags: <defaults>
</compile_context>

<pallas_src>
from functools import partial

import jax
import jax.numpy as jnp
from jax import lax
from jax.experimental import pallas as pl
from jax.experimental.pallas import tpu as pltpu

EPS = 1e-5                     # PyTorch BatchNorm1d default eps
MATMUL_DTYPE = jnp.bfloat16    # MXU-native matmul inputs; normalization stays f32.


# ----------------------------- kernel ---------------------------------------

def _fcblock_kernel(x_ref, w_ref, gamma_ref, beta_ref, o_ref, acc_ref):
    k = pl.program_id(1)

    @pl.when(k == 0)
    def _():
        acc_ref[...] = jnp.zeros_like(acc_ref)

    # Linear (bias omitted -- it cancels exactly under training-mode BatchNorm):
    # bf16 inputs, f32 accumulation on the MXU, accumulated across the K axis.
    acc_ref[...] += jnp.dot(x_ref[...], w_ref[...], preferred_element_type=jnp.float32)

    @pl.when(k == pl.num_programs(1) - 1)
    def _():
        y = acc_ref[...]                                   # (B, TN) f32
        inv_b = 1.0 / y.shape[0]
        # Fused batch reductions: one pass produces sum(y) and sum(y*y);
        # biased variance via E[y^2] - mean^2 (clamped against f32 cancellation).
        mean = jnp.sum(y, axis=0, keepdims=True) * inv_b
        mean_sq = jnp.sum(y * y, axis=0, keepdims=True) * inv_b
        var = jnp.maximum(mean_sq - mean * mean, 0.0)
        # BN affine folded into one mul+add: out = y*scale + shift, then ReLU.
        scale = gamma_ref[...] * lax.rsqrt(var + EPS)      # rsqrt -> EUP slot
        shift = beta_ref[...] - mean * scale
        o_ref[...] = jnp.maximum(y * scale + shift, 0.0).astype(o_ref.dtype)


# ----------------------------- tiling ---------------------------------------

def _choose_tiles(B, K, N_pad, out_bytes, budget=40 * 1024 * 1024):
    """Pick (tn, tk) tiles that fit a v7x-safe VMEM budget (~40 MiB of 64 MiB)."""

    def lane_divisors(dim, cap):
        return [t for t in range(128, min(dim, cap) + 1, 128) if dim % t == 0][::-1]

    # K tiling only when large and cleanly 128-divisible; otherwise monolithic
    # (a full-extent block is always legal for the second-to-last dim).
    tk = K
    if K % 128 == 0 and K > 1024:
        cands = lane_divisors(K, 1024)
        if cands:
            tk = cands[0]

    tn_cands = lane_divisors(N_pad, 1024) or [N_pad]
    # Keep >= 2 feature tiles when possible so v7x's two TensorCores both get work.
    pref = [t for t in tn_cands if N_pad // t >= 2] or tn_cands

    def vmem_bytes(tn, tk_):
        return (2 * B * tk_ * 2            # x double-buffer (bf16)
                + 2 * tk_ * tn * 2         # weight double-buffer (bf16)
                + 2 * B * tn * out_bytes   # output double-buffer
                + 3 * B * tn * 4           # f32 accumulator + live epilogue temps
                + 4 * tn * 4)              # gamma/beta buffers

    for tn in pref:
        if vmem_bytes(tn, tk) <= budget:
            return tn, tk
    # TODO(synk): cap B per call (or tile K harder) if even the smallest
    # lane-dense feature tile exceeds the v7x VMEM budget for huge batches.
    return pref[-1], tk


# ----------------------------- host API -------------------------------------

def prepare_fcblock_params(w, b, gamma, beta):
    """ONE-TIME parameter transform (do at init, NOT per forward call).

    * Weight stored as (in_features, out_features_padded) bf16 so the hot path
      never pays the w.T.astype(bf16) HBM round trip again.
    * out_features padded up to a multiple of 128 (zero columns) so output
      tiles are lane-dense; padded columns produce exact zeros and are sliced off.
    * Linear bias dropped: training-mode BatchNorm subtracts the batch mean, so
      the bias cancels exactly.
    """
    del b  # cancels exactly under batch-statistics BatchNorm
    n, k = w.shape
    n_pad = ((n + 127) // 128) * 128
    w_t = w.T.astype(MATMUL_DTYPE)
    gamma2 = gamma.reshape(1, n).astype(jnp.float32)
    beta2 = beta.reshape(1, n).astype(jnp.float32)
    if n_pad != n:
        pad = n_pad - n
        w_t = jnp.pad(w_t, ((0, 0), (0, pad)))
        gamma2 = jnp.pad(gamma2, ((0, 0), (0, pad)))
        beta2 = jnp.pad(beta2, ((0, 0), (0, pad)))
    return w_t, gamma2, beta2


@partial(jax.jit, static_argnames=("out_features", "out_dtype"))
def fcblock_forward(x, w_t, gamma2, beta2, *, out_features, out_dtype=jnp.bfloat16):
    """FCBlock forward: Linear (no bias) -> BatchNorm1d (batch stats) -> ReLU.

    x:      (B, in_features) float32
    w_t:    (in_features, out_features_padded) bf16   (from prepare_fcblock_params)
    gamma2: (1, out_features_padded) f32, beta2: (1, out_features_padded) f32
    """
    B, K = x.shape
    K_w, N_pad = w_t.shape
    assert K == K_w, "x / prepared-weight in_features mismatch"
    if B < 2:
        # PyTorch BatchNorm1d raises for batch size 1 in training mode.
        raise ValueError("FCBlock (training-mode BatchNorm) requires batch > 1")

    out_bytes = jnp.dtype(out_dtype).itemsize
    tn, tk = _choose_tiles(B, K, N_pad, out_bytes)
    grid = (N_pad // tn, pl.cdiv(K, tk))   # features parallel, K reduction last

    # Only remaining per-call wrapper op; negligible at small B.
    # TODO(synk): for very large B, keep a persistent bf16 copy of x instead.
    x_lp = x.astype(MATMUL_DTYPE)

    out = pl.pallas_call(
        _fcblock_kernel,
        out_shape=jax.ShapeDtypeStruct((B, N_pad), out_dtype),
        grid_spec=pltpu.PrefetchScalarGridSpec(
            num_scalar_prefetch=0,
            grid=grid,
            in_specs=[
                pl.BlockSpec((B, tk), lambda j, k: (0, k)),   # x: K-tiled, batch resident
                pl.BlockSpec((tk, tn), lambda j, k: (k, j)),  # weight tile (double-buffered)
                pl.BlockSpec((1, tn), lambda j, k: (0, j)),   # gamma tile
                pl.BlockSpec((1, tn), lambda j, k: (0, j)),   # beta tile
            ],
            out_specs=pl.BlockSpec((B, tn), lambda j, k: (0, j)),  # lane-dense stores
            scratch_shapes=[pltpu.VMEM((B, tn), jnp.float32)],     # f32 accumulator
        ),
        compiler_params=pltpu.CompilerParams(
            # Feature axis parallel (v7x: 2 TCs split the tiles); K axis arbitrary.
            dimension_semantics=("parallel", "arbitrary"),
            # 48 MiB: fits v7x's 64 MiB VMEM, well above default scoped limits.
            vmem_limit_bytes=48 * 1024 * 1024,
        ),
    )(x_lp, w_t, gamma2, beta2)

    return out if N_pad == out_features else out[:, :out_features]


# ----------------------------- references -----------------------------------

def _reference_matched(x, w, gamma, beta):
    """Mirrors kernel numerics (bf16 matmul, f32 BN via E[y^2]-mean^2, bias dropped)."""
    y = jnp.dot(x.astype(MATMUL_DTYPE), w.T.astype(MATMUL_DTYPE),
                preferred_element_type=jnp.float32)
    mean = jnp.mean(y, axis=0, keepdims=True)
    var = jnp.maximum(jnp.mean(y * y, axis=0, keepdims=True) - mean * mean, 0.0)
    out = (y - mean) * (gamma.reshape(1, -1) * lax.rsqrt(var + EPS)) + beta.reshape(1, -1)
    return jnp.maximum(out, 0.0)


def _reference_f32(x, w, b, gamma, beta):
    """Full-f32 PyTorch-semantics reference: Linear(+bias) -> BN1d(train) -> ReLU."""
    y = x @ w.T + b.reshape(1, -1)
    mean = jnp.mean(y, axis=0, keepdims=True)
    var = jnp.mean((y - mean) ** 2, axis=0, keepdims=True)
    out = (y - mean) / jnp.sqrt(var + EPS) * gamma.reshape(1, -1) + beta.reshape(1, -1)
    return jnp.maximum(out, 0.0)


if __name__ == "__main__":
    # Small PointNet-style FC block: 256 -> 1024, batch 16 (grid = 2 feature tiles).
    batch, in_features, out_features = 16, 256, 1024

    key = jax.random.PRNGKey(0)
    kx, kw, kb, kg, kbt = jax.random.split(key, 5)
    bound = 1.0 / (in_features ** 0.5)
    x = jax.random.normal(kx, (batch, in_features), dtype=jnp.float32)
    w = jax.random.uniform(kw, (out_features, in_features), jnp.float32, -bound, bound)
    b = jax.random.uniform(kb, (out_features,), jnp.float32, -bound, bound)
    gamma = 1.0 + 0.1 * jax.random.normal(kg, (out_features,), jnp.float32)
    beta = 0.1 * jax.random.normal(kbt, (out_features,), jnp.float32)

    # One-time parameter preparation (outside the per-call hot path).
    w_t, gamma2, beta2 = prepare_fcblock_params(w, b, gamma, beta)

    out = fcblock_forward(x, w_t, gamma2, beta2, out_features=out_features)
    jax.block_until_ready(out)
    assert out.shape == (batch, out_features)
    assert out.dtype == jnp.bfloat16

    out_f32 = out.astype(jnp.float32)

    # (1) matched-precision reference (bf16 matmul, f32 BN): bf16-store tolerance.
    ref_m = _reference_matched(x, w, gamma, beta)
    assert jnp.allclose(out_f32, ref_m, atol=2e-2, rtol=2e-2), "mismatch vs matched-precision ref"

    # (2) full-f32 PyTorch-semantics reference (with bias): bf16 matmul+store tolerance.
    ref_f = _reference_f32(x, w, b, gamma, beta)
    assert jnp.allclose(out_f32, ref_f, atol=5e-2, rtol=5e-2), "mismatch vs f32 semantic ref"

    print("KERNEL_OK")
</pallas_src>

<mosaic_0001>
module attributes {stable_mosaic.version = 11 : i64} {
  func.func @_fcblock_kernel(%arg0: i32, %arg1: i32, %arg2: memref<16x256xbf16, #tpu.memory_space<vmem>>, %arg3: memref<256x512xbf16, #tpu.memory_space<vmem>>, %arg4: memref<1x512xf32, #tpu.memory_space<vmem>>, %arg5: memref<1x512xf32, #tpu.memory_space<vmem>>, %arg6: memref<16x512xbf16, #tpu.memory_space<vmem>>, %arg7: memref<16x512xf32, #tpu.memory_space<vmem>>) attributes {dimension_semantics = [#tpu.dimension_semantics<parallel>, #tpu.dimension_semantics<arbitrary>], iteration_bounds = array<i64: 2, 1>, scalar_prefetch = 0 : i64, scratch_operands = 1 : i64, tpu.core_type = #tpu.core_type<tc>, window_params = [{transform_indices = @transform_0, window_bounds = array<i64: 16, 256>}, {transform_indices = @transform_1, window_bounds = array<i64: 256, 512>}, {transform_indices = @transform_2, window_bounds = array<i64: 1, 512>}, {transform_indices = @transform_3, window_bounds = array<i64: 1, 512>}, {transform_indices = @transform_4, window_bounds = array<i64: 16, 512>}]} {
    %c0_i32 = arith.constant 0 : i32
    %0 = arith.cmpi eq, %arg1, %c0_i32 : i32
    %1 = arith.extui %0 : i1 to i32
    %c0_i32_0 = arith.constant 0 : i32
    %2 = arith.cmpi ne, %1, %c0_i32_0 : i32
    scf.if %2 {
      %cst_10 = arith.constant 0.000000e+00 : f32
      %12 = vector.broadcast %cst_10 : f32 to vector<16x512xf32>
      %c0_11 = arith.constant 0 : index
      %c0_12 = arith.constant 0 : index
      %13 = vector.load %arg7[%c0_11, %c0_12] : memref<16x512xf32, #tpu.memory_space<vmem>>, vector<16x512xf32>
      tpu.vector_store %arg7[%c0_11, %c0_12], %12 {strides = array<i32>} : memref<16x512xf32, #tpu.memory_space<vmem>>, vector<16x512xf32>,
    } else {
    }
    %c0 = arith.constant 0 : index
    %c0_1 = arith.constant 0 : index
    %3 = vector.load %arg7[%c0, %c0_1] : memref<16x512xf32, #tpu.memory_space<vmem>>, vector<16x512xf32>
    %c0_2 = arith.constant 0 : index
    %c0_3 = arith.constant 0 : index
    %4 = vector.load %arg2[%c0_2, %c0_3] : memref<16x256xbf16, #tpu.memory_space<vmem>>, vector<16x256xbf16>
    %c0_4 = arith.constant 0 : index
    %c0_5 = arith.constant 0 : index
    %5 = vector.load %arg3[%c0_4, %c0_5] : memref<256x512xbf16, #tpu.memory_space<vmem>>, vector<256x512xbf16>
    %cst = arith.constant dense<0.000000e+00> : vector<16x512xf32>
    %6 = tpu.matmul %4, %5, %cst {dimension_numbers = #tpu.dot_dimension_numbers<[1], [0], [0], [1], [0, 0, 1, 1], [], []>} : vector<16x256xbf16>, vector<256x512xbf16>, vector<16x512xf32> -> vector<16x512xf32>
    %7 = arith.addf %3, %6 : vector<16x512xf32>
    %c0_6 = arith.constant 0 : index
    %c0_7 = arith.constant 0 : index
    %8 = vector.load %arg7[%c0_6, %c0_7] : memref<16x512xf32, #tpu.memory_space<vmem>>, vector<16x512xf32>
    tpu.vector_store %arg7[%c0_6, %c0_7], %7 {strides = array<i32>} : memref<16x512xf32, #tpu.memory_space<vmem>>, vector<16x512xf32>,
    %c0_i32_8 = arith.constant 0 : i32
    %9 = arith.cmpi eq, %arg1, %c0_i32_8 : i32
    %10 = arith.extui %9 : i1 to i32
    %c0_i32_9 = arith.constant 0 : i32
    %11 = arith.cmpi ne, %10, %c0_i32_9 : i32
    scf.if %11 {
      %c0_10 = arith.constant 0 : index
      %c0_11 = arith.constant 0 : index
      %12 = vector.load %arg7[%c0_10, %c0_11] : memref<16x512xf32, #tpu.memory_space<vmem>>, vector<16x512xf32>
      %cst_12 = arith.constant dense<0.000000e+00> : vector<512xf32>
      %13 = vector.multi_reduction <add>, %12, %cst_12 [0] : vector<16x512xf32> to vector<512xf32>
      %14 = vector.shape_cast %13 : vector<512xf32> to vector<1x512xf32>
      %cst_13 = arith.constant 6.250000e-02 : f32
      %15 = vector.broadcast %cst_13 : f32 to vector<1x512xf32>
      %16 = arith.mulf %14, %15 : vector<1x512xf32>
      %17 = arith.mulf %12, %12 : vector<16x512xf32>
      %cst_14 = arith.constant dense<0.000000e+00> : vector<512xf32>
      %18 = vector.multi_reduction <add>, %17, %cst_14 [0] : vector<16x512xf32> to vector<512xf32>
      %19 = vector.shape_cast %18 : vector<512xf32> to vector<1x512xf32>
      %cst_15 = arith.constant 6.250000e-02 : f32
      %20 = vector.broadcast %cst_15 : f32 to vector<1x512xf32>
      %21 = arith.mulf %19, %20 : vector<1x512xf32>
      %22 = arith.mulf %16, %16 : vector<1x512xf32>
      %23 = arith.subf %21, %22 : vector<1x512xf32>
      %cst_16 = arith.constant 0.000000e+00 : f32
      %24 = vector.broadcast %cst_16 : f32 to vector<1x512xf32>
      %25 = arith.maximumf %23, %24 : vector<1x512xf32>
      %c0_17 = arith.constant 0 : index
      %c0_18 = arith.constant 0 : index
      %26 = vector.load %arg4[%c0_17, %c0_18] : memref<1x512xf32, #tpu.memory_space<vmem>>, vector<1x512xf32>
      %cst_19 = arith.constant 9.99999974E-6 : f32
      %27 = vector.broadcast %cst_19 : f32 to vector<1x512xf32>
      %28 = arith.addf %25, %27 : vector<1x512xf32>
      %29 = math.rsqrt %28 : vector<1x512xf32>
      %30 = arith.mulf %26, %29 : vector<1x512xf32>
      %c0_20 = arith.constant 0 : index
      %c0_21 = arith.constant 0 : index
      %31 = vector.load %arg5[%c0_20, %c0_21] : memref<1x512xf32, #tpu.memory_space<vmem>>, vector<1x512xf32>
      %32 = arith.mulf %16, %30 : vector<1x512xf32>
      %33 = arith.subf %31, %32 : vector<1x512xf32>
      %34 = vector.broadcast %30 : vector<1x512xf32> to vector<16x512xf32>
      %35 = arith.mulf %12, %34 : vector<16x512xf32>
      %36 = vector.broadcast %33 : vector<1x512xf32> to vector<16x512xf32>
      %37 = arith.addf %35, %36 : vector<16x512xf32>
      %cst_22 = arith.constant 0.000000e+00 : f32
      %38 = vector.broadcast %cst_22 : f32 to vector<16x512xf32>
      %39 = arith.maximumf %37, %38 : vector<16x512xf32>
      %40 = arith.truncf %39 : vector<16x512xf32> to vector<16x512xbf16>
      %c0_23 = arith.constant 0 : index
      %c0_24 = arith.constant 0 : index
      %41 = vector.load %arg6[%c0_23, %c0_24] : memref<16x512xbf16, #tpu.memory_space<vmem>>, vector<16x512xbf16>
      tpu.vector_store %arg6[%c0_23, %c0_24], %40 {strides = array<i32>} : memref<16x512xbf16, #tpu.memory_space<vmem>>, vector<16x512xbf16>,
    } else {
    }
    return
  }
  func.func @transform_0(%arg0: i32, %arg1: i32) -> (i32, i32) {
    %c0_i32 = arith.constant 0 : i32
    %c0_i32_0 = arith.constant 0 : i32
    return %c0_i32, %arg1 : i32, i32
  }
  func.func @transform_1(%arg0: i32, %arg1: i32) -> (i32, i32) {
    %c0_i32 = arith.constant 0 : i32
    return %arg1, %arg0 : i32, i32
  }
  func.func @transform_2(%arg0: i32, %arg1: i32) -> (i32, i32) {
    %c0_i32 = arith.constant 0 : i32
    %c0_i32_0 = arith.constant 0 : i32
    return %c0_i32, %arg0 : i32, i32
  }
  func.func @transform_3(%arg0: i32, %arg1: i32) -> (i32, i32) {
    %c0_i32 = arith.constant 0 : i32
    %c0_i32_0 = arith.constant 0 : i32
    return %c0_i32, %arg0 : i32, i32
  }
  func.func @transform_4(%arg0: i32, %arg1: i32) -> (i32, i32) {
    %c0_i32 = arith.constant 0 : i32
    %c0_i32_0 = arith.constant 0 : i32
    return %c0_i32, %arg0 : i32, i32
  }
}

</mosaic_0001>

<llo_original>
// kernel: fcblock_forward.1
$region0: #{fcblock_forward.1}
  #allocation0 [shape = 'u32[]', space=smem, size = 0x4, offset = 0x4, fixed_abs, tag = 'smem constant byte address 0x4 - core index']
  #allocation1 [shape = 'u32[144,128]{1,0:T(1,128)}', space=vmem, size = 0x12000, scoped, tag = 'internal scratch']
  #allocation2 [shape = 'f32[16,512]{1,0:T(8,128)}', space=vmem, size = 0x8000, scoped, tag = 'scratch operand']
  %s0 = inlined_call_operand.vmem [shape: bf16[16,256], index: 0, kind: input, shape index: {}]
  %s1 = inlined_call_operand.hbm [shape: bf16[256,1024], index: 1, kind: input, shape index: {}]
  %s2 = inlined_call_operand.vmem [shape: f32[1,1024], index: 2, kind: input, shape index: {}]
  %s3 = inlined_call_operand.vmem [shape: f32[1,1024], index: 3, kind: input, shape index: {}]
  %s4 = inlined_call_operand.hbm [shape: bf16[16,1024], index: 4, kind: output, shape index: {}]
  %s5 = sld [smem:[#allocation0]]
  $region61: #{fcblock_forward.1} parent=0
    _
  %s7 = ssub.s32 1, %s5
  %s8 = scalar_select 0, %s7, %s5
  $region1: #{fcblock_forward.1} parent=0
    #allocation3 [shape = 'u8[524288]{0}', space=vmem, size = 0x80000, scoped, tag = 'input window, operand 1']
    #allocation4 [shape = 's32[2]{0}', space=sflag, size = 0x8, scoped, tag = 'scoped memory for fcblock_forward.1']
    #allocation5 [shape = 's32[2]{0}', space=sflag, size = 0x8, scoped, tag = 'scoped memory for fcblock_forward.1']
    #allocation6 [shape = 'u8[32768]{0}', space=vmem, size = 0x8000, scoped, tag = 'output window, operand 0']
    %9 = vsyncpa [#allocation4], 0
    %s10 = scalar_lea.sflag [#allocation4], 1
    %11 = vsyncpa %s10, 0
    %12 = vsyncpa [#allocation5], 0
    %s13 = scalar_lea.sflag [#allocation5], 1
    %14 = vsyncpa %s13, 0
    loop: start=0, step=1, limit=4
    $region2: #{fcblock_forward.1} parent=1 // loop_pre_header
      _
    $region3: #{fcblock_forward.1} parent=1 // loop_header
      %s16 = sphi 0, %s20
      %p17 = scmp.ge.s32.totalorder %s16, 4
      %s23 = sphi 0, %s35
      %s24 = sphi 0, %s31
      %s25 = sphi 0, %s23
      %s26 = sphi 0, %s24
      %s27 = sphi 0, %s25
      %s28 = sphi 0, %s26
      %s38 = sphi 0, %s40
      %s41 = sphi 0, %s38
      %s42 = sphi 0, %s41
      %s58 = sphi 0, %s42
      %s66 = sphi 0, %s68
      %s69 = sphi 0, %s66
      %s70 = sphi 0, %s69
      %s86 = sphi 0, %s70
      %s92 = sphi 0, %s94
      %s95 = sphi 0, %s92
      %s96 = sphi 0, %s95
      %s112 = sphi 0, %s96
      %s118 = sphi 0, %s120
      %s121 = sphi 0, %s118
      %s122 = sphi 0, %s121
      %s138 = sphi 0, %s122
      %s144 = sphi 0, %s146
      %s147 = sphi 0, %s144
      %s148 = sphi 0, %s147
      %s164 = sphi 0, %s148
    $region4: #{fcblock_forward.1} parent=1 // loop_header_branch
      %19 = sbr.rel (%p17) target = $region8
    $region5: #{fcblock_forward.1} parent=1 // loop_body
      %s21 = ssub.s32 %s16, 1
      %s22 = ssub.s32 %s16, 2
      %s29 = sadd.s32 1, %s24
      %p30 = scmp.ge.s32.totalorder %s29, 1
      %s31 = scalar_select %p30, 0, %s29
      %s32 = sadd.s32 1, %s23
      %s33 = scalar_select %p30, %s32, %s23
      %p34 = scmp.ge.s32.totalorder %s33, 2
      %s35 = scalar_select %p34, 0, %s33
      %s36 = ssub.s32 %s24, %s31
      %p37 = scmp.eq.s32.totalorder %s36, 0
      %s39 = sadd.s32 %s38, 1
      %s40 = scalar_select %p37, %s38, %s39
      %p43 = pneg %p37
      %p44 = scmp.eq.s32.totalorder %s16, 1
      %p45 = por %p43, %p44
      %p46 = scmp.ne.s32.totalorder %s38, %s41
      %p47 = scmp.eq.s32.totalorder %s16, 0
      %p48 = por %p46, %p47
      %p49 = scmp.ne.s32.totalorder %s38, %s41
      %p50 = scmp.eq.s32.totalorder %s21, 1
      %p51 = por %p49, %p50
      %p52 = scmp.ne.s32.totalorder %s41, %s42
      %p53 = scmp.eq.s32.totalorder %s21, 0
      %p54 = por %p52, %p53
      %p55 = scmp.ne.s32.totalorder %s41, %s42
      %p56 = scmp.eq.s32.totalorder %s22, 1
      %p57 = por %p55, %p56
      %p59 = scmp.ne.s32.totalorder %s42, %s58
      %p60 = scmp.eq.s32.totalorder %s22, 0
      %p61 = por %p59, %p60
      %s62 = ssub.s32 %s24, %s31
      %s63 = ssub.s32 %s23, %s35
      %s64 = sor.u32 %s62, %s63
      %p65 = scmp.eq.s32.totalorder %s64, 0
      %s67 = sadd.s32 %s66, 1
      %s68 = scalar_select %p65, %s66, %s67
      %p71 = pneg %p65
      %p72 = scmp.eq.s32.totalorder %s16, 1
      %p73 = por %p71, %p72
      %p74 = scmp.ne.s32.totalorder %s66, %s69
      %p75 = scmp.eq.s32.totalorder %s16, 0
      %p76 = por %p74, %p75
      %p77 = scmp.ne.s32.totalorder %s66, %s69
      %p78 = scmp.eq.s32.totalorder %s21, 1
      %p79 = por %p77, %p78
      %p80 = scmp.ne.s32.totalorder %s69, %s70
      %p81 = scmp.eq.s32.totalorder %s21, 0
      %p82 = por %p80, %p81
      %p83 = scmp.ne.s32.totalorder %s69, %s70
      %p84 = scmp.eq.s32.totalorder %s22, 1
      %p85 = por %p83, %p84
      %p87 = scmp.ne.s32.totalorder %s70, %s86
      %p88 = scmp.eq.s32.totalorder %s22, 0
      %p89 = por %p87, %p88
      %s90 = ssub.s32 %s23, %s35
      %p91 = scmp.eq.s32.totalorder %s90, 0
      %s93 = sadd.s32 %s92, 1
      %s94 = scalar_select %p91, %s92, %s93
      %p97 = pneg %p91
      %p98 = scmp.eq.s32.totalorder %s16, 1
      %p99 = por %p97, %p98
      %p100 = scmp.ne.s32.totalorder %s92, %s95
      %p101 = scmp.eq.s32.totalorder %s16, 0
      %p102 = por %p100, %p101
      %p103 = scmp.ne.s32.totalorder %s92, %s95
      %p104 = scmp.eq.s32.totalorder %s21, 1
      %p105 = por %p103, %p104
      %p106 = scmp.ne.s32.totalorder %s95, %s96
      %p107 = scmp.eq.s32.totalorder %s21, 0
      %p108 = por %p106, %p107
      %p109 = scmp.ne.s32.totalorder %s95, %s96
      %p110 = scmp.eq.s32.totalorder %s22, 1
      %p111 = por %p109, %p110
      %p113 = scmp.ne.s32.totalorder %s96, %s112
      %p114 = scmp.eq.s32.totalorder %s22, 0
      %p115 = por %p113, %p114
      %s116 = ssub.s32 %s23, %s35
      %p117 = scmp.eq.s32.totalorder %s116, 0
      %s119 = sadd.s32 %s118, 1
      %s120 = scalar_select %p117, %s118, %s119
      %p123 = pneg %p117
      %p124 = scmp.eq.s32.totalorder %s16, 1
      %p125 = por %p123, %p124
      %p126 = scmp.ne.s32.totalorder %s118, %s121
      %p127 = scmp.eq.s32.totalorder %s16, 0
      %p128 = por %p126, %p127
      %p129 = scmp.ne.s32.totalorder %s118, %s121
      %p130 = scmp.eq.s32.totalorder %s21, 1
      %p131 = por %p129, %p130
      %p132 = scmp.ne.s32.totalorder %s121, %s122
      %p133 = scmp.eq.s32.totalorder %s21, 0
      %p134 = por %p132, %p133
      %p135 = scmp.ne.s32.totalorder %s121, %s122
      %p136 = scmp.eq.s32.totalorder %s22, 1
      %p137 = por %p135, %p136
      %p139 = scmp.ne.s32.totalorder %s122, %s138
      %p140 = scmp.eq.s32.totalorder %s22, 0
      %p141 = por %p139, %p140
      %s142 = ssub.s32 %s23, %s35
      %p143 = scmp.eq.s32.totalorder %s142, 0
      %s145 = sadd.s32 %s144, 1
      %s146 = scalar_select %p143, %s144, %s145
      %p149 = pneg %p143
      %p150 = scmp.eq.s32.totalorder %s16, 1
      %p151 = por %p149, %p150
      %p152 = scmp.ne.s32.totalorder %s144, %s147
      %p153 = scmp.eq.s32.totalorder %s16, 0
      %p154 = por %p152, %p153
      %p155 = scmp.ne.s32.totalorder %s144, %s147
      %p156 = scmp.eq.s32.totalorder %s21, 1
      %p157 = por %p155, %p156
      %p158 = scmp.ne.s32.totalorder %s147, %s148
      %p159 = scmp.eq.s32.totalorder %s21, 0
      %p160 = por %p158, %p159
      %p161 = scmp.ne.s32.totalorder %s147, %s148
      %p162 = scmp.eq.s32.totalorder %s22, 1
      %p163 = por %p161, %p162
      %p165 = scmp.ne.s32.totalorder %s148, %s164
      %p166 = scmp.eq.s32.totalorder %s22, 0
      %p167 = por %p165, %p166
      %p168 = scmp.le.s32.totalorder 1, %s16
      %p169 = scmp.lt.s32.totalorder %s16, 3
      %p170 = pnand %p168, %p169
      %p171 = pneg %p170
      // Predicated region
      $region9: #{fcblock_forward.1} parent=5 // pred_check
        _
      $region10: #{fcblock_forward.1} parent=5 // pred_check_branch
        %173 = sbr.rel (%p170) target = $region12
      $region11: #{fcblock_forward.1} parent=5 // pred_region
        %s174 = ssub.s32 %s16, 1
        // Predicated region
        $region13: #{fcblock_forward.1} parent=11 // pred_check
          %p175 = pneg %p54
        $region14: #{fcblock_forward.1} parent=11 // pred_check_branch
          %177 = sbr.rel (%p175) target = $region16
        $region15: #{fcblock_forward.1} parent=11 // pred_region
          %s178 = smul.u32 2, %s26
          %p179 = scmp.lt.s32.totalorder %s178, 1
          %s180 = scalar_select %p179, %s178, 1
          %s181 = smul.addr %s180, 4
          %s182 = scalar_lea.vmem %s0, %s181
          %s183 = smul.u32 2, %s26
        $region16: #{fcblock_forward.1} parent=11 // pred_fallthru
          _
      $region12: #{fcblock_forward.1} parent=5 // pred_fallthru
        _
      %p184 = scmp.lt.s32.totalorder %s16, 2
      // Predicated region
      $region17: #{fcblock_forward.1} parent=5 // pred_check
        %p185 = pneg %p184
      $region18: #{fcblock_forward.1} parent=5 // pred_check_branch
        %187 = sbr.rel (%p185) target = $region20
      $region19: #{fcblock_forward.1} parent=5 // pred_region
        // Predicated region
        $region21: #{fcblock_forward.1} parent=19 // pred_check
          %p188 = pneg %p76
        $region22: #{fcblock_forward.1} parent=19 // pred_check_branch
          %190 = sbr.rel (%p188) target = $region24
        $region23: #{fcblock_forward.1} parent=19 // pred_region
          %s191 = sand.u32 %s66, 1
          %s192 = scalar_lea.sflag [#allocation4], %s191
          %s193 = sand.u32 %s66, 1
          %s194 = smul.addr %s193, 512
          %s195 = scalar_lea.vmem [#allocation3], %s194
          %s196 = smul.u32 32, %s24
          %s197 = smul.u32 4, %s23
          %s199 = ssub.s32 8192, 8192
          %200 = vsyncadd %s192, %s199
          %s201 = smul.addr %s196, 8
          %s202 = sadd.s32 %s197, %s201
          %s203 = smul.addr %s202, 64
          %s204 = scalar_lea.hbm %s1, %s203
          %s205 = sshll.u32 %s195, 4
          %s206 = int_to_ptr.vmem [resolvable:$true] %s205
          %211 = dma.hbm_to_vmem [thread:$0]  %s204, 8192, %s206, %s192, 512, 256, 16
        $region24: #{fcblock_forward.1} parent=19 // pred_fallthru
          _
        // Predicated region
        $region25: #{fcblock_forward.1} parent=19 // pred_check
          %p212 = pneg %p102
        $region26: #{fcblock_forward.1} parent=19 // pred_check_branch
          %214 = sbr.rel (%p212) target = $region28
        $region27: #{fcblock_forward.1} parent=19 // pred_region
          %s215 = smul.u32 4, %s23
          %p216 = scmp.lt.s32.totalorder %s215, 7
          %s217 = scalar_select %p216, %s215, 7
          %s218 = scalar_lea.vmem %s2, %s217
          %s219 = smul.u32 4, %s23
        $region28: #{fcblock_forward.1} parent=19 // pred_fallthru
          _
        // Predicated region
        $region29: #{fcblock_forward.1} parent=19 // pred_check
          %p220 = pneg %p128
        $region30: #{fcblock_forward.1} parent=19 // pred_check_branch
          %222 = sbr.rel (%p220) target = $region32
        $region31: #{fcblock_forward.1} parent=19 // pred_region
          %s223 = smul.u32 4, %s23
          %p224 = scmp.lt.s32.totalorder %s223, 7
          %s225 = scalar_select %p224, %s223, 7
          %s226 = scalar_lea.vmem %s3, %s225
          %s227 = smul.u32 4, %s23
        $region32: #{fcblock_forward.1} parent=19 // pred_fallthru
          _
      $region20: #{fcblock_forward.1} parent=5 // pred_fallthru
        _
      %p228 = scmp.le.s32.totalorder 1, %s16
      %p229 = scmp.lt.s32.totalorder %s16, 3
      %p230 = pnand %p228, %p229
      %p231 = pneg %p230
      // Predicated region
      $region33: #{fcblock_forward.1} parent=5 // pred_check
        _
      $region34: #{fcblock_forward.1} parent=5 // pred_check_branch
        %233 = sbr.rel (%p230) target = $region36
      $region35: #{fcblock_forward.1} parent=5 // pred_region
        %s234 = ssub.s32 %s16, 1
        %s235 = sand.u32 %s69, 1
        %s236 = scalar_lea.sflag [#allocation4], %s235
        %s237 = sand.u32 %s69, 1
        %s238 = smul.addr %s237, 512
        %s239 = scalar_lea.vmem [#allocation3], %s238
        // Predicated region
        $region37: #{fcblock_forward.1} parent=35 // pred_check
          %p240 = pneg %p82
        $region38: #{fcblock_forward.1} parent=35 // pred_check_branch
          %242 = sbr.rel (%p240) target = $region40
        $region39: #{fcblock_forward.1} parent=35 // pred_region
          %243 = dma.done %s236, 8192
        $region40: #{fcblock_forward.1} parent=35 // pred_fallthru
          _
        %s244 = smul.u32 2, %s26
        %p245 = scmp.lt.s32.totalorder %s244, 1
        %s246 = scalar_select %p245, %s244, 1
        %s247 = smul.addr %s246, 4
        %s248 = scalar_lea.vmem %s0, %s247
        %p249 = pneg %p54
        %p250 = pneg %p51
        %s251 = sand.u32 %s69, 1
        %s252 = scalar_lea.sflag [#allocation4], %s251
        %s253 = sand.u32 %s69, 1
        %s254 = smul.addr %s253, 512
        %s255 = scalar_lea.vmem [#allocation3], %s254
        %p256 = pneg %p82
        %p257 = pneg %p79
        %s258 = smul.u32 4, %s25
        %p259 = scmp.lt.s32.totalorder %s258, 7
        %s260 = scalar_select %p259, %s258, 7
        %s261 = scalar_lea.vmem %s2, %s260
        %p262 = pneg %p108
        %p263 = pneg %p105
        %s264 = smul.u32 4, %s25
        %p265 = scmp.lt.s32.totalorder %s264, 7
        %s266 = scalar_select %p265, %s264, 7
        %s267 = scalar_lea.vmem %s3, %s266
        %p268 = pneg %p134
        %p269 = pneg %p131
        %p270 = pneg %p160
        %p271 = pneg %p157
        %s272 = sand.u32 %s147, 1
        %s273 = scalar_lea.sflag [#allocation5], %s272
        %s274 = sand.u32 %s147, 1
        %s275 = smul.addr %s274, 32
        %s276 = scalar_lea.vmem [#allocation6], %s275
        %s277 = smul.u32 2, %s26
        %p278 = scmp.lt.s32.totalorder %s277, 1
        %s279 = scalar_select %p278, %s277, 1
        %s280 = smul.addr %s279, 4
        %s281 = scalar_lea.vmem %s0, %s280
        %s282 = smul.u32 2, %s26
        %s283 = smul.u32 32, %s26
        %s284 = smul.u32 4, %s25
        %s285 = smul.u32 4, %s25
        %p286 = scmp.lt.s32.totalorder %s285, 7
        %s287 = scalar_select %p286, %s285, 7
        %s288 = scalar_lea.vmem %s2, %s287
        %s289 = smul.u32 4, %s25
        %s290 = smul.u32 4, %s25
        %p291 = scmp.lt.s32.totalorder %s290, 7
        %s292 = scalar_select %p291, %s290, 7
        %s293 = scalar_lea.vmem %s3, %s292
        %s294 = smul.u32 4, %s25
        %s295 = smul.u32 4, %s25
        %p296 = scmp.eq.s32.totalorder %s26, 0
        // Predicated region
        $region41: #{fcblock_forward.1} parent=35 // pred_check
          %p297 = pneg %p296
        $region42: #{fcblock_forward.1} parent=35 // pred_check_branch
          %299 = sbr.rel (%p297) target = $region44
        $region43: #{fcblock_forward.1} parent=35 // pred_region
          %300 = vst [vmem:[#allocation2] sm:$0xff] 0.0
          %301 = vst [vmem:[#allocation2 + $0x8] sm:$0xff] 0.0
          %302 = vst [vmem:[#allocation2 + $0x10] sm:$0xff] 0.0
          %303 = vst [vmem:[#allocation2 + $0x18] sm:$0xff] 0.0
          %304 = vst [vmem:[#allocation2 + $0x20] sm:$0xff] 0.0
          %305 = vst [vmem:[#allocation2 + $0x28] sm:$0xff] 0.0
          %306 = vst [vmem:[#allocation2 + $0x30] sm:$0xff] 0.0
          %307 = vst [vmem:[#allocation2 + $0x38] sm:$0xff] 0.0
        $region44: #{fcblock_forward.1} parent=35 // pred_fallthru
          _
        %v308 = vld [vmem:[#allocation2] sm:$0xff]
        %v309 = vld [vmem:[#allocation2 + $0x8] sm:$0xff]
        %v310 = vld [vmem:[#allocation2 + $0x10] sm:$0xff]
        %v311 = vld [vmem:[#allocation2 + $0x18] sm:$0xff]
        %v312 = vld [vmem:[#allocation2 + $0x20] sm:$0xff]
        %v313 = vld [vmem:[#allocation2 + $0x28] sm:$0xff]
        %v314 = vld [vmem:[#allocation2 + $0x30] sm:$0xff]
        %v315 = vld [vmem:[#allocation2 + $0x38] sm:$0xff]
        %v316 = vld [vmem:[%s281] sm:$0xff]
        %v317 = vld [vmem:[%s281 + $0x8] sm:$0xff]
        %v318 = vld [vmem:[%s239] sm:$0xff]
        %v319 = vld [vmem:[%s239 + $0x8] sm:$0xff]
        %v320 = vld [vmem:[%s239 + $0x10] sm:$0xff]
        %v321 = vld [vmem:[%s239 + $0x18] sm:$0xff]
        %v322 = vld [vmem:[%s239 + $0x20] sm:$0xff]
        %v323 = vld [vmem:[%s239 + $0x28] sm:$0xff]
        %v324 = vld [vmem:[%s239 + $0x30] sm:$0xff]
        %v325 = vld [vmem:[%s239 + $0x38] sm:$0xff]
        %v326 = vld [vmem:[%s239 + $0x40] sm:$0xff]
        %v327 = vld [vmem:[%s239 + $0x48] sm:$0xff]
        %v328 = vld [vmem:[%s239 + $0x50] sm:$0xff]
        %v329 = vld [vmem:[%s239 + $0x58] sm:$0xff]
        %v330 = vld [vmem:[%s239 + $0x60] sm:$0xff]
        %v331 = vld [vmem:[%s239 + $0x68] sm:$0xff]
        %v332 = vld [vmem:[%s239 + $0x70] sm:$0xff]
        %v333 = vld [vmem:[%s239 + $0x78] sm:$0xff]
        %v334 = vld [vmem:[%s239 + $0x80] sm:$0xff]
        %v335 = vld [vmem:[%s239 + $0x88] sm:$0xff]
        %v336 = vld [vmem:[%s239 + $0x90] sm:$0xff]
        %v337 = vld [vmem:[%s239 + $0x98] sm:$0xff]
        %v338 = vld [vmem:[%s239 + $0xa0] sm:$0xff]
        %v339 = vld [vmem:[%s239 + $0xa8] sm:$0xff]
        %v340 = vld [vmem:[%s239 + $0xb0] sm:$0xff]
        %v341 = vld [vmem:[%s239 + $0xb8] sm:$0xff]
        %v342 = vld [vmem:[%s239 + $0xc0] sm:$0xff]
        %v343 = vld [vmem:[%s239 + $0xc8] sm:$0xff]
        %v344 = vld [vmem:[%s239 + $0xd0] sm:$0xff]
        %v345 = vld [vmem:[%s239 + $0xd8] sm:$0xff]
        %v346 = vld [vmem:[%s239 + $0xe0] sm:$0xff]
        %v347 = vld [vmem:[%s239 + $0xe8] sm:$0xff]
        %v348 = vld [vmem:[%s239 + $0xf0] sm:$0xff]
        %v349 = vld [vmem:[%s239 + $0xf8] sm:$0xff]
        %v350 = vld [vmem:[%s239 + $0x100] sm:$0xff]
        %v351 = vld [vmem:[%s239 + $0x108] sm:$0xff]
        %v352 = vld [vmem:[%s239 + $0x110] sm:$0xff]
        %v353 = vld [vmem:[%s239 + $0x118] sm:$0xff]
        %v354 = vld [vmem:[%s239 + $0x120] sm:$0xff]
        %v355 = vld [vmem:[%s239 + $0x128] sm:$0xff]
        %v356 = vld [vmem:[%s239 + $0x130] sm:$0xff]
        %v357 = vld [vmem:[%s239 + $0x138] sm:$0xff]
        %v358 = vld [vmem:[%s239 + $0x140] sm:$0xff]
        %v359 = vld [vmem:[%s239 + $0x148] sm:$0xff]
        %v360 = vld [vmem:[%s239 + $0x150] sm:$0xff]
        %v361 = vld [vmem:[%s239 + $0x158] sm:$0xff]
        %v362 = vld [vmem:[%s239 + $0x160] sm:$0xff]
        %v363 = vld [vmem:[%s239 + $0x168] sm:$0xff]
        %v364 = vld [vmem:[%s239 + $0x170] sm:$0xff]
        %v365 = vld [vmem:[%s239 + $0x178] sm:$0xff]
        %v366 = vld [vmem:[%s239 + $0x180] sm:$0xff]
        %v367 = vld [vmem:[%s239 + $0x188] sm:$0xff]
        %v368 = vld [vmem:[%s239 + $0x190] sm:$0xff]
        %v369 = vld [vmem:[%s239 + $0x198] sm:$0xff]
        %v370 = vld [vmem:[%s239 + $0x1a0] sm:$0xff]
        %v371 = vld [vmem:[%s239 + $0x1a8] sm:$0xff]
        %v372 = vld [vmem:[%s239 + $0x1b0] sm:$0xff]
        %v373 = vld [vmem:[%s239 + $0x1b8] sm:$0xff]
        %v374 = vld [vmem:[%s239 + $0x1c0] sm:$0xff]
        %v375 = vld [vmem:[%s239 + $0x1c8] sm:$0xff]
        %v376 = vld [vmem:[%s239 + $0x1d0] sm:$0xff]
        %v377 = vld [vmem:[%s239 + $0x1d8] sm:$0xff]
        %v378 = vld [vmem:[%s239 + $0x1e0] sm:$0xff]
        %v379 = vld [vmem:[%s239 + $0x1e8] sm:$0xff]
        %v380 = vld [vmem:[%s239 + $0x1f0] sm:$0xff]
        %v381 = vld [vmem:[%s239 + $0x1f8] sm:$0xff]
        %v384 = vunpack.c.l.b16 %v316
        %v385 = vunpack.c.h.b16 %v316
        %v386 = vunpack.c.l.b16 %v317
        %v387 = vunpack.c.h.b16 %v317
        %v388 = vpack.c.b16 %v386, %v384
        %v389 = vpack.c.b16 %v387, %v385
        %v456 = vunpack.c.l.b16 %v318
        %v457 = vunpack.c.h.b16 %v318
        %v458 = vunpack.c.l.b16 %v319
        %v459 = vunpack.c.h.b16 %v319
        %v460 = vunpack.c.l.b16 %v320
        %v461 = vunpack.c.h.b16 %v320
        %v462 = vunpack.c.l.b16 %v321
        %v463 = vunpack.c.h.b16 %v321
        %v464 = vunpack.c.l.b16 %v322
        %v465 = vunpack.c.h.b16 %v322
        %v466 = vunpack.c.l.b16 %v323
        %v467 = vunpack.c.h.b16 %v323
        %v468 = vunpack.c.l.b16 %v324
        %v469 = vunpack.c.h.b16 %v324
        %v470 = vunpack.c.l.b16 %v325
        %v471 = vunpack.c.h.b16 %v325
        %v472 = vunpack.c.l.b16 %v326
        %v473 = vunpack.c.h.b16 %v326
        %v474 = vunpack.c.l.b16 %v327
        %v475 = vunpack.c.h.b16 %v327
        %v476 = vunpack.c.l.b16 %v328
        %v477 = vunpack.c.h.b16 %v328
        %v478 = vunpack.c.l.b16 %v329
        %v479 = vunpack.c.h.b16 %v329
        %v480 = vunpack.c.l.b16 %v330
        %v481 = vunpack.c.h.b16 %v330
        %v482 = vunpack.c.l.b16 %v331
        %v483 = vunpack.c.h.b16 %v331
        %v484 = vunpack.c.l.b16 %v332
        %v485 = vunpack.c.h.b16 %v332
        %v486 = vunpack.c.l.b16 %v333
        %v487 = vunpack.c.h.b16 %v333
        %v488 = vunpack.c.l.b16 %v334
        %v489 = vunpack.c.h.b16 %v334
        %v490 = vunpack.c.l.b16 %v335
        %v491 = vunpack.c.h.b16 %v335
        %v492 = vunpack.c.l.b16 %v336
        %v493 = vunpack.c.h.b16 %v336
        %v494 = vunpack.c.l.b16 %v337
        %v495 = vunpack.c.h.b16 %v337
        %v496 = vunpack.c.l.b16 %v338
        %v497 = vunpack.c.h.b16 %v338
        %v498 = vunpack.c.l.b16 %v339
        %v499 = vunpack.c.h.b16 %v339
        %v500 = vunpack.c.l.b16 %v340
        %v501 = vunpack.c.h.b16 %v340
        %v502 = vunpack.c.l.b16 %v341
        %v503 = vunpack.c.h.b16 %v341
        %v504 = vunpack.c.l.b16 %v342
        %v505 = vunpack.c.h.b16 %v342
        %v506 = vunpack.c.l.b16 %v343
        %v507 = vunpack.c.h.b16 %v343
        %v508 = vunpack.c.l.b16 %v344
        %v509 = vunpack.c.h.b16 %v344
        %v510 = vunpack.c.l.b16 %v345
        %v511 = vunpack.c.h.b16 %v345
        %v512 = vunpack.c.l.b16 %v346
        %v513 = vunpack.c.h.b16 %v346
        %v514 = vunpack.c.l.b16 %v347
        %v515 = vunpack.c.h.b16 %v347
        %v516 = vunpack.c.l.b16 %v348
        %v517 = vunpack.c.h.b16 %v348
        %v518 = vunpack.c.l.b16 %v349
        %v519 = vunpack.c.h.b16 %v349
        %v520 = vunpack.c.l.b16 %v350
        %v521 = vunpack.c.h.b16 %v350
        %v522 = vunpack.c.l.b16 %v351
        %v523 = vunpack.c.h.b16 %v351
        %v524 = vunpack.c.l.b16 %v352
        %v525 = vunpack.c.h.b16 %v352
        %v526 = vunpack.c.l.b16 %v353
        %v527 = vunpack.c.h.b16 %v353
        %v528 = vunpack.c.l.b16 %v354
        %v529 = vunpack.c.h.b16 %v354
        %v530 = vunpack.c.l.b16 %v355
        %v531 = vunpack.c.h.b16 %v355
        %v532 = vunpack.c.l.b16 %v356
        %v533 = vunpack.c.h.b16 %v356
        %v534 = vunpack.c.l.b16 %v357
        %v535 = vunpack.c.h.b16 %v357
        %v536 = vunpack.c.l.b16 %v358
        %v537 = vunpack.c.h.b16 %v358
        %v538 = vunpack.c.l.b16 %v359
        %v539 = vunpack.c.h.b16 %v359
        %v540 = vunpack.c.l.b16 %v360
        %v541 = vunpack.c.h.b16 %v360
        %v542 = vunpack.c.l.b16 %v361
        %v543 = vunpack.c.h.b16 %v361
        %v544 = vunpack.c.l.b16 %v362
        %v545 = vunpack.c.h.b16 %v362
        %v546 = vunpack.c.l.b16 %v363
        %v547 = vunpack.c.h.b16 %v363
        %v548 = vunpack.c.l.b16 %v364
        %v549 = vunpack.c.h.b16 %v364
        %v550 = vunpack.c.l.b16 %v365
        %v551 = vunpack.c.h.b16 %v365
        %v552 = vunpack.c.l.b16 %v366
        %v553 = vunpack.c.h.b16 %v366
        %v554 = vunpack.c.l.b16 %v367
        %v555 = vunpack.c.h.b16 %v367
        %v556 = vunpack.c.l.b16 %v368
        %v557 = vunpack.c.h.b16 %v368
        %v558 = vunpack.c.l.b16 %v369
        %v559 = vunpack.c.h.b16 %v369
        %v560 = vunpack.c.l.b16 %v370
        %v561 = vunpack.c.h.b16 %v370
        %v562 = vunpack.c.l.b16 %v371
        %v563 = vunpack.c.h.b16 %v371
        %v564 = vunpack.c.l.b16 %v372
        %v565 = vunpack.c.h.b16 %v372
        %v566 = vunpack.c.l.b16 %v373
        %v567 = vunpack.c.h.b16 %v373
        %v568 = vunpack.c.l.b16 %v374
        %v569 = vunpack.c.h.b16 %v374
        %v570 = vunpack.c.l.b16 %v375
        %v571 = vunpack.c.h.b16 %v375
        %v572 = vunpack.c.l.b16 %v376
        %v573 = vunpack.c.h.b16 %v376
        %v574 = vunpack.c.l.b16 %v377
        %v575 = vunpack.c.h.b16 %v377
        %v576 = vunpack.c.l.b16 %v378
        %v577 = vunpack.c.h.b16 %v378
        %v578 = vunpack.c.l.b16 %v379
        %v579 = vunpack.c.h.b16 %v379
        %v580 = vunpack.c.l.b16 %v380
        %v581 = vunpack.c.h.b16 %v380
        %v582 = vunpack.c.l.b16 %v381
        %v583 = vunpack.c.h.b16 %v381
        %v584 = vpack.c.b16 %v460, %v456
        %v585 = vpack.c.b16 %v461, %v457
        %v586 = vpack.c.b16 %v462, %v458
        %v587 = vpack.c.b16 %v463, %v459
        %v588 = vpack.c.b16 %v468, %v464
        %v589 = vpack.c.b16 %v469, %v465
        %v590 = vpack.c.b16 %v470, %v466
        %v591 = vpack.c.b16 %v471, %v467
        %v592 = vpack.c.b16 %v476, %v472
        %v593 = vpack.c.b16 %v477, %v473
        %v594 = vpack.c.b16 %v478, %v474
        %v595 = vpack.c.b16 %v479, %v475
        %v596 = vpack.c.b16 %v484, %v480
        %v597 = vpack.c.b16 %v485, %v481
        %v598 = vpack.c.b16 %v486, %v482
        %v599 = vpack.c.b16 %v487, %v483
        %v600 = vpack.c.b16 %v492, %v488
        %v601 = vpack.c.b16 %v493, %v489
        %v602 = vpack.c.b16 %v494, %v490
        %v603 = vpack.c.b16 %v495, %v491
        %v604 = vpack.c.b16 %v500, %v496
        %v605 = vpack.c.b16 %v501, %v497
        %v606 = vpack.c.b16 %v502, %v498
        %v607 = vpack.c.b16 %v503, %v499
        %v608 = vpack.c.b16 %v508, %v504
        %v609 = vpack.c.b16 %v509, %v505
        %v610 = vpack.c.b16 %v510, %v506
        %v611 = vpack.c.b16 %v511, %v507
        %v612 = vpack.c.b16 %v516, %v512
        %v613 = vpack.c.b16 %v517, %v513
        %v614 = vpack.c.b16 %v518, %v514
        %v615 = vpack.c.b16 %v519, %v515
        %v616 = vpack.c.b16 %v524, %v520
        %v617 = vpack.c.b16 %v525, %v521
        %v618 = vpack.c.b16 %v526, %v522
        %v619 = vpack.c.b16 %v527, %v523
        %v620 = vpack.c.b16 %v532, %v528
        %v621 = vpack.c.b16 %v533, %v529
        %v622 = vpack.c.b16 %v534, %v530
        %v623 = vpack.c.b16 %v535, %v531
        %v624 = vpack.c.b16 %v540, %v536
        %v625 = vpack.c.b16 %v541, %v537
        %v626 = vpack.c.b16 %v542, %v538
        %v627 = vpack.c.b16 %v543, %v539
        %v628 = vpack.c.b16 %v548, %v544
        %v629 = vpack.c.b16 %v549, %v545
        %v630 = vpack.c.b16 %v550, %v546
        %v631 = vpack.c.b16 %v551, %v547
        %v632 = vpack.c.b16 %v556, %v552
        %v633 = vpack.c.b16 %v557, %v553
        %v634 = vpack.c.b16 %v558, %v554
        %v635 = vpack.c.b16 %v559, %v555
        %v636 = vpack.c.b16 %v564, %v560
        %v637 = vpack.c.b16 %v565, %v561
        %v638 = vpack.c.b16 %v566, %v562
        %v639 = vpack.c.b16 %v567, %v563
        %v640 = vpack.c.b16 %v572, %v568
        %v641 = vpack.c.b16 %v573, %v569
        %v642 = vpack.c.b16 %v574, %v570
        %v643 = vpack.c.b16 %v575, %v571
        %v644 = vpack.c.b16 %v580, %v576
        %v645 = vpack.c.b16 %v581, %v577
        %v646 = vpack.c.b16 %v582, %v578
        %v647 = vpack.c.b16 %v583, %v579
        %712 = vmatprep.subr.bf16.mxu0 %v585
        %713 = vmatpush1.bf16.msra.mxu0 %v584
        %714 = vmatprep.subr.bf16.mxu0 %v589
        %715 = vmatpush1.bf16.msra.mxu0 %v588
        %716 = vmatprep.subr.bf16.mxu0 %v593
        %717 = vmatpush1.bf16.msra.mxu0 %v592
        %718 = vmatprep.subr.bf16.mxu0 %v597
        %719 = vmatpush1.bf16.msra.mxu0 %v596
        %720 = vmatprep.subr.bf16.mxu0 %v601
        %721 = vmatpush1.bf16.msra.mxu0 %v600
        %722 = vmatprep.subr.bf16.mxu0 %v605
        %723 = vmatpush1.bf16.msra.mxu0 %v604
        %724 = vmatprep.subr.bf16.mxu0 %v609
        %725 = vmatpush1.bf16.msra.mxu0 %v608
        %726 = vmatprep.subr.bf16.mxu0 %v613
        %727 = vmatpush1.bf16.msra.mxu0 %v612
        %728 = vmatprep.subr.bf16.mxu0 %v617
        %729 = vmatpush1.bf16.msra.mxu0 %v616
        %730 = vmatprep.subr.bf16.mxu0 %v621
        %731 = vmatpush1.bf16.msra.mxu0 %v620
        %732 = vmatprep.subr.bf16.mxu0 %v625
        %733 = vmatpush1.bf16.msra.mxu0 %v624
        %734 = vmatprep.subr.bf16.mxu0 %v629
        %735 = vmatpush1.bf16.msra.mxu0 %v628
        %736 = vmatprep.subr.bf16.mxu0 %v633
        %737 = vmatpush1.bf16.msra.mxu0 %v632
        %738 = vmatprep.subr.bf16.mxu0 %v637
        %739 = vmatpush1.bf16.msra.mxu0 %v636
        %740 = vmatprep.subr.bf16.mxu0 %v641
        %741 = vmatpush1.bf16.msra.mxu0 %v640
        %742 = vmatprep.subr.bf16.mxu0 %v645
        %743 = vmatpush1.bf16.msra.mxu0 %v644
        %744 = vmatprep.mubr.bf16.mxu0 %v389
        %745 = vmatmul.mubr.bf16.gmra.mrb[0].mxu0 %v388
        %v746 = vpop.f32.mrb[0].mxu0
        %v747 = vadd.f32 0.0, %v746
        %v748 = vpop.f32.mrb[0].mxu0
        %v749 = vadd.f32 0.0, %v748
        %v750 = vpop.f32.mrb[0].mxu0
        %v751 = vadd.f32 0.0, %v750
        %v752 = vpop.f32.mrb[0].mxu0
        %v753 = vadd.f32 0.0, %v752
        %754 = vdwg.mxu0
        %755 = vmatprep.subr.bf16.mxu0 %v587
        %756 = vmatpush1.bf16.msra.mxu0 %v586
        %757 = vmatprep.subr.bf16.mxu0 %v591
        %758 = vmatpush1.bf16.msra.mxu0 %v590
        %759 = vmatprep.subr.bf16.mxu0 %v595
        %760 = vmatpush1.bf16.msra.mxu0 %v594
        %761 = vmatprep.subr.bf16.mxu0 %v599
        %762 = vmatpush1.bf16.msra.mxu0 %v598
        %763 = vmatprep.subr.bf16.mxu0 %v603
        %764 = vmatpush1.bf16.msra.mxu0 %v602
        %765 = vmatprep.subr.bf16.mxu0 %v607
        %766 = vmatpush1.bf16.msra.mxu0 %v606
        %767 = vmatprep.subr.bf16.mxu0 %v611
        %768 = vmatpush1.bf16.msra.mxu0 %v610
        %769 = vmatprep.subr.bf16.mxu0 %v615
        %770 = vmatpush1.bf16.msra.mxu0 %v614
        %771 = vmatprep.subr.bf16.mxu0 %v619
        %772 = vmatpush1.bf16.msra.mxu0 %v618
        %773 = vmatprep.subr.bf16.mxu0 %v623
        %774 = vmatpush1.bf16.msra.mxu0 %v622
        %775 = vmatprep.subr.bf16.mxu0 %v627
        %776 = vmatpush1.bf16.msra.mxu0 %v626
        %777 = vmatprep.subr.bf16.mxu0 %v631
        %778 = vmatpush1.bf16.msra.mxu0 %v630
        %779 = vmatprep.subr.bf16.mxu0 %v635
        %780 = vmatpush1.bf16.msra.mxu0 %v634
        %781 = vmatprep.subr.bf16.mxu0 %v639
        %782 = vmatpush1.bf16.msra.mxu0 %v638
        %783 = vmatprep.subr.bf16.mxu0 %v643
        %784 = vmatpush1.bf16.msra.mxu0 %v642
        %785 = vmatprep.subr.bf16.mxu0 %v647
        %786 = vmatpush1.bf16.msra.mxu0 %v646
        %787 = vmatprep.mubr.bf16.mxu0 %v389
        %788 = vmatmul.mubr.bf16.gmra.mrb[0].mxu0 %v388
        %v789 = vpop.f32.mrb[0].mxu0
        %v790 = vadd.f32 0.0, %v789
        %v791 = vpop.f32.mrb[0].mxu0
        %v792 = vadd.f32 0.0, %v791
        %v793 = vpop.f32.mrb[0].mxu0
        %v794 = vadd.f32 0.0, %v793
        %v795 = vpop.f32.mrb[0].mxu0
        %v796 = vadd.f32 0.0, %v795
        %797 = vdwg.mxu0
        %v798 = vadd.f32 %v308, %v747
        %v799 = vadd.f32 %v309, %v749
        %v800 = vadd.f32 %v310, %v790
        %v801 = vadd.f32 %v311, %v792
        %v802 = vadd.f32 %v312, %v751
        %v803 = vadd.f32 %v313, %v753
        %v804 = vadd.f32 %v314, %v794
        %v805 = vadd.f32 %v315, %v796
        %806 = vst [vmem:[#allocation2] sm:$0xff] %v798
        %807 = vst [vmem:[#allocation2 + $0x8] sm:$0xff] %v799
        %808 = vst [vmem:[#allocation2 + $0x10] sm:$0xff] %v800
        %809 = vst [vmem:[#allocation2 + $0x18] sm:$0xff] %v801
        %810 = vst [vmem:[#allocation2 + $0x20] sm:$0xff] %v802
        %811 = vst [vmem:[#allocation2 + $0x28] sm:$0xff] %v803
        %812 = vst [vmem:[#allocation2 + $0x30] sm:$0xff] %v804
        %813 = vst [vmem:[#allocation2 + $0x38] sm:$0xff] %v805
        // Predicated region
        $region45: #{fcblock_forward.1} parent=35 // pred_check
          %p814 = pneg %p296
        $region46: #{fcblock_forward.1} parent=35 // pred_check_branch
          %816 = sbr.rel (%p814) target = $region48
        $region47: #{fcblock_forward.1} parent=35 // pred_region
          %v817 = vld [vmem:[#allocation2] sm:$0xff]
          %v818 = vld [vmem:[#allocation2 + $0x8] sm:$0xff]
          %v819 = vld [vmem:[#allocation2 + $0x10] sm:$0xff]
          %v820 = vld [vmem:[#allocation2 + $0x18] sm:$0xff]
          %v821 = vld [vmem:[#allocation2 + $0x20] sm:$0xff]
          %v822 = vld [vmem:[#allocation2 + $0x28] sm:$0xff]
          %v823 = vld [vmem:[#allocation2 + $0x30] sm:$0xff]
          %v824 = vld [vmem:[#allocation2 + $0x38] sm:$0xff]
          %v825 = vadd.f32 %v817, %v821
          %v826 = vrot.slane %v825, 4
          %v827 = vadd.f32 %v825, %v826
          %v828 = vrot.slane %v827, 2
          %v829 = vadd.f32 %v827, %v828
          %v830 = vrot.slane %v829, 1
          %v831 = vadd.f32 %v829, %v830
          %v832 = vadd.f32 %v818, %v822
          %v833 = vrot.slane %v832, 4
          %v834 = vadd.f32 %v832, %v833
          %v835 = vrot.slane %v834, 2
          %v836 = vadd.f32 %v834, %v835
          %v837 = vrot.slane %v836, 1
          %v838 = vadd.f32 %v836, %v837
          %v839 = vadd.f32 %v819, %v823
          %v840 = vrot.slane %v839, 4
          %v841 = vadd.f32 %v839, %v840
          %v842 = vrot.slane %v841, 2
          %v843 = vadd.f32 %v841, %v842
          %v844 = vrot.slane %v843, 1
          %v845 = vadd.f32 %v843, %v844
          %v846 = vadd.f32 %v820, %v824
          %v847 = vrot.slane %v846, 4
          %v848 = vadd.f32 %v846, %v847
          %v849 = vrot.slane %v848, 2
          %v850 = vadd.f32 %v848, %v849
          %v851 = vrot.slane %v850, 1
          %v852 = vadd.f32 %v850, %v851
          %v853 = vmul.f32 %v831, 0.0625
          %v854 = vmul.f32 %v838, 0.0625
          %v855 = vmul.f32 %v845, 0.0625
          %v856 = vmul.f32 %v852, 0.0625
          %v857 = vmul.f32 %v817, %v817
          %v858 = vmul.f32 %v818, %v818
          %v859 = vmul.f32 %v819, %v819
          %v860 = vmul.f32 %v820, %v820
          %v861 = vmul.f32 %v821, %v821
          %v862 = vmul.f32 %v822, %v822
          %v863 = vmul.f32 %v823, %v823
          %v864 = vmul.f32 %v824, %v824
          %v865 = vadd.f32 %v857, %v861
          %v866 = vrot.slane %v865, 4
          %v867 = vadd.f32 %v865, %v866
          %v868 = vrot.slane %v867, 2
          %v869 = vadd.f32 %v867, %v868
          %v870 = vrot.slane %v869, 1
          %v871 = vadd.f32 %v869, %v870
          %v872 = vadd.f32 %v858, %v862
          %v873 = vrot.slane %v872, 4
          %v874 = vadd.f32 %v872, %v873
          %v875 = vrot.slane %v874, 2
          %v876 = vadd.f32 %v874, %v875
          %v877 = vrot.slane %v876, 1
          %v878 = vadd.f32 %v876, %v877
          %v879 = vadd.f32 %v859, %v863
          %v880 = vrot.slane %v879, 4
          %v881 = vadd.f32 %v879, %v880
          %v882 = vrot.slane %v881, 2
          %v883 = vadd.f32 %v881, %v882
          %v884 = vrot.slane %v883, 1
          %v885 = vadd.f32 %v883, %v884
          %v886 = vadd.f32 %v860, %v864
          %v887 = vrot.slane %v886, 4
          %v888 = vadd.f32 %v886, %v887
          %v889 = vrot.slane %v888, 2
          %v890 = vadd.f32 %v888, %v889
          %v891 = vrot.slane %v890, 1
          %v892 = vadd.f32 %v890, %v891
          %v893 = vmul.f32 %v871, 0.0625
          %v894 = vmul.f32 %v878, 0.0625
          %v895 = vmul.f32 %v885, 0.0625
          %v896 = vmul.f32 %v892, 0.0625
          %v897 = vmul.f32 %v853, %v853
          %v898 = vmul.f32 %v854, %v854
          %v899 = vmul.f32 %v855, %v855
          %v900 = vmul.f32 %v856, %v856
          %v901 = vsub.f32 %v893, %v897
          %v902 = vsub.f32 %v894, %v898
          %v903 = vsub.f32 %v895, %v899
          %v904 = vsub.f32 %v896, %v900
          %v905 = vmax.f32 %v901, 0.0
          %v906 = vmax.f32 %v902, 0.0
          %v907 = vmax.f32 %v903, 0.0
          %v908 = vmax.f32 %v904, 0.0
          %v909 = vld [vmem:[%s288] sm:$0xf]
          %v910 = vadd.f32 %v905, 1e-05
          %v911 = vadd.f32 %v906, 1e-05
          %v912 = vadd.f32 %v907, 1e-05
          %v913 = vadd.f32 %v908, 1e-05
          %v914 = vrsqrt.pop %v910
          %v915 = vrsqrt.pop %v911
          %v916 = vrsqrt.pop %v912
          %v917 = vrsqrt.pop %v913
          %v922 = vcombine.low %v914, %v915
          %v923 = vcombine.low %v916, %v917
          %v925 = vunpack.c.l.s4 1966171168
          %v926 = vunpack.c.0.s8 %v925
          %v927 = vlaneseq
          %v928 = vshrl.u32 %v927, 7
          %v929 = vsub.s32 %v926, %v928
          %v930 = vrot.slane %v922, %v929
          %v932 = vunpack.c.l.s4 1966171168
          %v933 = vunpack.c.0.s8 %v932
          %v934 = vlaneseq
          %v935 = vshrl.u32 %v934, 7
          %v936 = vsub.s32 %v933, %v935
          %v937 = vrot.slane %v923, %v936
          %v938 = vcombine.low %v930, %v937
          %v940 = vunpack.c.l.s4 1966171168
          %v941 = vunpack.c.0.s8 %v940
          %v942 = vlaneseq
          %v943 = vshrl.u32 %v942, 7
          %v944 = vsub.s32 %v941, %v943
          %v945 = vrot.slane %v938, %v944
          %v947 = vmul.f32 %v909, %v945
          %v948 = vld [vmem:[%s293] sm:$0xf]
          %v950 = vlaneseq
          %v951 = vshrl.u32 %v950, 7
          %v952 = vsub.s32 0, %v951
          %v953 = vrot.slane %v947, %v952
          %v954 = vlaneseq
          %v955 = vshrl.u32 %v954, 7
          %v956 = vsub.s32 1, %v955
          %v957 = vrot.slane %v947, %v956
          %v958 = vlaneseq
          %v959 = vshrl.u32 %v958, 7
          %v960 = vsub.s32 2, %v959
          %v961 = vrot.slane %v947, %v960
          %v962 = vlaneseq
          %v963 = vshrl.u32 %v962, 7
          %v964 = vsub.s32 3, %v963
          %v965 = vrot.slane %v947, %v964
          %v970 = vmul.f32 %v853, %v953
          %v971 = vmul.f32 %v854, %v957
          %v972 = vmul.f32 %v855, %v961
          %v973 = vmul.f32 %v856, %v965
          %v978 = vcombine.low %v970, %v971
          %v979 = vcombine.low %v972, %v973
          %v981 = vunpack.c.l.s4 1966171168
          %v982 = vunpack.c.0.s8 %v981
          %v983 = vlaneseq
          %v984 = vshrl.u32 %v983, 7
          %v985 = vsub.s32 %v982, %v984
          %v986 = vrot.slane %v978, %v985
          %v988 = vunpack.c.l.s4 1966171168
          %v989 = vunpack.c.0.s8 %v988
          %v990 = vlaneseq
          %v991 = vshrl.u32 %v990, 7
          %v992 = vsub.s32 %v989, %v991
          %v993 = vrot.slane %v979, %v992
          %v994 = vcombine.low %v986, %v993
          %v996 = vunpack.c.l.s4 1966171168
          %v997 = vunpack.c.0.s8 %v996
          %v998 = vlaneseq
          %v999 = vshrl.u32 %v998, 7
          %v1000 = vsub.s32 %v997, %v999
          %v1001 = vrot.slane %v994, %v1000
          %v1003 = vsub.f32 %v948, %v1001
          %v1004 = vmul.f32 %v817, %v953
          %v1005 = vmul.f32 %v818, %v957
          %v1006 = vmul.f32 %v819, %v961
          %v1007 = vmul.f32 %v820, %v965
          %v1008 = vmul.f32 %v821, %v953
          %v1009 = vmul.f32 %v822, %v957
          %v1010 = vmul.f32 %v823, %v961
          %v1011 = vmul.f32 %v824, %v965
          %v1013 = vlaneseq
          %v1014 = vshrl.u32 %v1013, 7
          %v1015 = vsub.s32 0, %v1014
          %v1016 = vrot.slane %v1003, %v1015
          %v1017 = vlaneseq
          %v1018 = vshrl.u32 %v1017, 7
          %v1019 = vsub.s32 1, %v1018
          %v1020 = vrot.slane %v1003, %v1019
          %v1021 = vlaneseq
          %v1022 = vshrl.u32 %v1021, 7
          %v1023 = vsub.s32 2, %v1022
          %v1024 = vrot.slane %v1003, %v1023
          %v1025 = vlaneseq
          %v1026 = vshrl.u32 %v1025, 7
          %v1027 = vsub.s32 3, %v1026
          %v1028 = vrot.slane %v1003, %v1027
          %v1033 = vadd.f32 %v1004, %v1016
          %v1034 = vadd.f32 %v1005, %v1020
          %v1035 = vadd.f32 %v1006, %v1024
          %v1036 = vadd.f32 %v1007, %v1028
          %v1037 = vadd.f32 %v1008, %v1016
          %v1038 = vadd.f32 %v1009, %v1020
          %v1039 = vadd.f32 %v1010, %v1024
          %v1040 = vadd.f32 %v1011, %v1028
          %v1041 = vmax.f32 %v1033, 0.0
          %v1042 = vmax.f32 %v1034, 0.0
          %v1043 = vmax.f32 %v1035, 0.0
          %v1044 = vmax.f32 %v1036, 0.0
          %v1045 = vmax.f32 %v1037, 0.0
          %v1046 = vmax.f32 %v1038, 0.0
          %v1047 = vmax.f32 %v1039, 0.0
          %v1048 = vmax.f32 %v1040, 0.0
          %v1049 = vpack.c.bf16 %v1045, %v1041
          %v1050 = vpack.c.bf16 %v1046, %v1042
          %v1051 = vpack.c.bf16 %v1047, %v1043
          %v1052 = vpack.c.bf16 %v1048, %v1044
          %v1057 = vunpack.c.l.b16 %v1049
          %v1058 = vunpack.c.l.b16 %v1050
          %v1059 = vunpack.c.l.b16 %v1051
          %v1060 = vunpack.c.l.b16 %v1052
          %v1061 = vunpack.c.h.b16 %v1049
          %v1062 = vunpack.c.h.b16 %v1050
          %v1063 = vunpack.c.h.b16 %v1051
          %v1064 = vunpack.c.h.b16 %v1052
          %v1065 = vpack.c.b16 %v1058, %v1057
          %v1066 = vpack.c.b16 %v1060, %v1059
          %v1067 = vpack.c.b16 %v1062, %v1061
          %v1068 = vpack.c.b16 %v1064, %v1063
          %1073 = vst [vmem:[%s276] sm:$0xff] %v1065
          %1074 = vst [vmem:[%s276 + $0x8] sm:$0xff] %v1066
          %1075 = vst [vmem:[%s276 + $0x10] sm:$0xff] %v1067
          %1076 = vst [vmem:[%s276 + $0x18] sm:$0xff] %v1068
        $region48: #{fcblock_forward.1} parent=35 // pred_fallthru
          _
        %s1077 = sand.u32 %s147, 1
        %s1078 = scalar_lea.sflag [#allocation5], %s1077
        %s1079 = sand.u32 %s147, 1
        %s1080 = smul.addr %s1079, 32
        %s1081 = scalar_lea.vmem [#allocation6], %s1080
        // Predicated region
        $region49: #{fcblock_forward.1} parent=35 // pred_check
          %p1082 = pneg %p157
        $region50: #{fcblock_forward.1} parent=35 // pred_check_branch
          %1084 = sbr.rel (%p1082) target = $region52
        $region51: #{fcblock_forward.1} parent=35 // pred_region
          %s1085 = smul.u32 4, %s25
          %s1087 = ssub.s32 512, 512
          %1088 = vsyncadd %s1078, %s1087
          %s1089 = smul.addr %s1085, 64
          %s1090 = scalar_lea.hbm %s4, %s1089
          %s1091 = sshll.u32 %s1081, 4
          %s1092 = int_to_ptr.vmem [resolvable:$true] %s1091
          %1097 = dma.vmem_to_hbm [thread:$0]  %s1092, 512, %s1090, %s1078, 256, 512, 16
        $region52: #{fcblock_forward.1} parent=35 // pred_fallthru
          _
      $region36: #{fcblock_forward.1} parent=5 // pred_fallthru
        _
      %p1098 = scmp.le.s32.totalorder 2, %s16
      // Predicated region
      $region53: #{fcblock_forward.1} parent=5 // pred_check
        %p1099 = pneg %p1098
      $region54: #{fcblock_forward.1} parent=5 // pred_check_branch
        %1101 = sbr.rel (%p1099) target = $region56
      $region55: #{fcblock_forward.1} parent=5 // pred_region
        %s1102 = ssub.s32 %s16, 2
        // Predicated region
        $region57: #{fcblock_forward.1} parent=55 // pred_check
          %p1103 = pneg %p163
        $region58: #{fcblock_forward.1} parent=55 // pred_check_branch
          %1105 = sbr.rel (%p1103) target = $region60
        $region59: #{fcblock_forward.1} parent=55 // pred_region
          %s1106 = sand.u32 %s148, 1
          %s1107 = scalar_lea.sflag [#allocation5], %s1106
          %s1108 = sand.u32 %s148, 1
          %s1109 = smul.addr %s1108, 32
          %s1110 = scalar_lea.vmem [#allocation6], %s1109
          %1111 = dma.done %s1107, 512
        $region60: #{fcblock_forward.1} parent=55 // pred_fallthru
          _
      $region56: #{fcblock_forward.1} parent=5 // pred_fallthru
        _
    $region6: #{fcblock_forward.1} parent=1 // loop_footer
      %s20 = sadd.s32 1, %s16
    $region7: #{fcblock_forward.1} parent=1 // loop_footer_branch
      %15 = sbr.rel target = $region3
    $region8: #{fcblock_forward.1} parent=1 // loop_exit
      _
    %1112 = vsyncpa [#allocation4], 1
    %s1113 = scalar_lea.sflag [#allocation4], 1
    %1114 = vsyncpa %s1113, 1
    %1115 = vsyncpa [#allocation5], 1
    %s1116 = scalar_lea.sflag [#allocation5], 1
    %1117 = vsyncpa %s1116, 1

</llo_original>
